<compile_context>
chip_gen: v7x
topology: tpu7x:2x2x1
jax: 0.10.0
libtpu: 0.0.40
codegen_flags: <defaults>
</compile_context>

<pallas_src>
import functools

import jax
import jax.numpy as jnp
from jax.experimental import pallas as pl
from jax.experimental.pallas import tpu as pltpu


def _device_kind() -> str:
    try:
        return jax.devices()[0].device_kind.lower()
    except Exception:
        return ""


def _physical_vmem_bytes(default: int = 64 * 1024 * 1024) -> int:
    try:
        return int(pltpu.get_tpu_info().vmem_capacity_bytes)
    except Exception:
        return default  # conservative (v7x-sized) fallback


def _mixup_ce_kernel(logits_ref, side_ref, part_ref, *, b_total, block_b, ragged,
                     compute_dtype):
    """One batch tile: d_i = lse_i - (lam_i*logit_{y1_i} + (1-lam_i)*logit_{y2_i})."""
    logits = logits_ref[...].astype(compute_dtype)            # [TB, C]
    tb, c = logits.shape

    side = side_ref[...]                                       # [TB, 3] f32 = (y1, y2, lam)
    y1 = side[:, 0:1].astype(jnp.int32)                        # truncation == .long() for ids >= 0
    y2 = side[:, 1:2].astype(jnp.int32)
    lam = side[:, 2:3].astype(compute_dtype)

    # numerically-stable softmax pieces; `shifted` is reused by the fused gather
    m = jnp.max(logits, axis=-1, keepdims=True)                 # [TB, 1]
    shifted = logits - m                                        # [TB, C]
    ex = jnp.exp(shifted)                                       # [TB, C] (EUP)
    lse_sh = jnp.log(jnp.sum(ex.astype(jnp.float32), axis=-1, keepdims=True))  # [TB,1] f32

    # fused mixup gather on the shifted logits: weights sum to 1 per row, so the
    # subtracted max cancels against lse_sh.
    col = jax.lax.broadcasted_iota(jnp.int32, (tb, c), 1)
    zero = jnp.asarray(0.0, compute_dtype)
    one = jnp.asarray(1.0, compute_dtype)
    w = jnp.where(col == y1, lam, zero) + jnp.where(col == y2, one - lam, zero)
    mixed_sh = jnp.sum((w * shifted).astype(jnp.float32), axis=-1, keepdims=True)  # [TB,1] f32

    d = lse_sh - mixed_sh                                       # [TB, 1] f32

    if not ragged:
        part_ref[...] = jnp.broadcast_to(jnp.sum(d, keepdims=True), part_ref.shape)
    else:
        i = pl.program_id(0)
        last = pl.num_programs(0) - 1

        @pl.when(i != last)
        def _():
            part_ref[...] = jnp.broadcast_to(jnp.sum(d, keepdims=True), part_ref.shape)

        @pl.when(i == last)
        def _():
            # padded rows of the ragged final tile hold garbage logits (maybe NaN);
            # zero them (select avoids NaN propagation) before the cross-row sum.
            row = i * block_b + jax.lax.broadcasted_iota(jnp.int32, d.shape, 0)
            dm = jnp.where(row < b_total, d, 0.0)
            part_ref[...] = jnp.broadcast_to(jnp.sum(dm, keepdims=True), part_ref.shape)


def mixup_loss(output, target, *, block_b=None, vmem_limit_bytes=None, compute_dtype=None):
    """output: [B, C] logits; target: [B, 3] = (y1, y2, lambda). Returns scalar mean loss."""
    B, C = output.shape
    itemsize = jnp.dtype(output.dtype).itemsize

    kind = _device_kind()
    two_core = ("v7" in kind) or ("v5p" in kind) or ("v4" in kind and "lite" not in kind)
    num_cores = 2 if two_core else 1

    if compute_dtype is None:
        # bf16 elementwise chain only where the VPU/EUP support it (v6e/v7x);
        # v5e has no bf16 VPU/EUP, so keep the f32 upcast path there.
        bf16_ok = ("v6" in kind) or ("v7" in kind)
        compute_dtype = jnp.bfloat16 if (output.dtype == jnp.bfloat16 and bf16_ok) else jnp.float32
    compute_itemsize = jnp.dtype(compute_dtype).itemsize

    physical_vmem = _physical_vmem_bytes()
    budget = (physical_vmem * 3) // 4                  # headroom for compiler scratch
    usable = budget - 4 * 1024 * 1024                  # side input / output / internal

    # VMEM bytes per batch row: 2x double-buffered logits tile + ~4 [TB,C] compute temps.
    per_row = C * (2 * itemsize + 4 * compute_itemsize)

    if block_b is None:
        rows_budget = max(8, (usable // per_row) // 8 * 8)
        # ~16 MiB of logits per tile is past the point of diminishing returns.
        rows_target = max(8, ((16 * 1024 * 1024) // (C * itemsize)) // 8 * 8)
        block_b = min(rows_budget, rows_target)
        if num_cores >= 2:
            # keep >= 2 grid steps so the "parallel" axis shards across TensorCores
            half = -(-B // num_cores)                  # ceil(B / num_cores)
            half = -(-half // 8) * 8                   # round up to sublane multiple
            block_b = min(block_b, max(8, half))
    if block_b >= B:
        block_b = B                                    # single full-batch tile
    else:
        block_b = max(8, (block_b // 8) * 8)           # sublane-aligned tiles

    grid = pl.cdiv(B, block_b)
    ragged = (B % block_b) != 0

    if vmem_limit_bytes is None:
        need = block_b * per_row + 4 * 1024 * 1024
        vmem_limit_bytes = int(min(max(need, 32 * 1024 * 1024), budget))

    # one small side array (y1, y2, lam) -> a single side DMA per grid step.
    side = target.astype(jnp.float32)                  # class ids exact below 2^24

    kernel = functools.partial(
        _mixup_ce_kernel,
        b_total=B, block_b=block_b, ragged=ragged, compute_dtype=compute_dtype,
    )

    partials = pl.pallas_call(
        kernel,
        out_shape=jax.ShapeDtypeStruct((grid, 128), jnp.float32),
        grid_spec=pltpu.PrefetchScalarGridSpec(
            num_scalar_prefetch=0,
            grid=(grid,),
            in_specs=[
                pl.BlockSpec((block_b, C), lambda i: (i, 0)),
                pl.BlockSpec((block_b, 3), lambda i: (i, 0)),
            ],
            out_specs=pl.BlockSpec((1, 128), lambda i: (i, 0)),
        ),
        compiler_params=pltpu.CompilerParams(
            dimension_semantics=("parallel",),
            vmem_limit_bytes=vmem_limit_bytes,
        ),
        cost_estimate=pl.CostEstimate(
            flops=8 * B * C,
            transcendentals=B * C,
            bytes_accessed=B * C * itemsize + B * 3 * 4 + grid * 128 * 4,
        ),
    )(output, side)

    # tiny final reduction outside the kernel (keeps the grid axis parallel)
    return jnp.sum(partials[:, 0]) / jnp.float32(B)


def mixup_loss_ref(output, target):
    """Pure-JAX reference of the PyTorch forward (2-D target branch, reduction='mean')."""
    logp = jax.nn.log_softmax(output.astype(jnp.float32), axis=-1)
    y1 = target[:, 0].astype(jnp.int32)
    y2 = target[:, 1].astype(jnp.int32)
    lam = target[:, 2].astype(jnp.float32)
    loss1 = -jnp.take_along_axis(logp, y1[:, None], axis=-1)[:, 0]
    loss2 = -jnp.take_along_axis(logp, y2[:, None], axis=-1)[:, 0]
    return jnp.mean(loss1 * lam + loss2 * (1.0 - lam))


if __name__ == "__main__":
    # TODO(synk): only the 2-D-target (mixup) branch of MixUpLoss.forward is kernelized,
    # with crit assumed to be CrossEntropyLoss (reduction forced to 'none') and outer
    # reduction 'mean'; the 1-D-target branch simply defers to crit(output, target).
    key = jax.random.PRNGKey(0)
    k_logits, k_y1, k_y2, k_lam, k2 = jax.random.split(key, 5)

    # Test 1: small shapes (single tile).
    B, C = 8, 32
    output = jax.random.normal(k_logits, (B, C), dtype=jnp.float32)
    y1 = jax.random.randint(k_y1, (B,), 0, C).astype(jnp.float32)
    y2 = jax.random.randint(k_y2, (B,), 0, C).astype(jnp.float32)
    lam = jax.random.uniform(k_lam, (B,), dtype=jnp.float32)
    target = jnp.stack([y1, y2, lam], axis=1)              # [B, 3]

    loss = mixup_loss(output, target)
    jax.block_until_ready(loss)
    ref = mixup_loss_ref(output, target)
    assert jnp.allclose(loss, ref, rtol=1e-5, atol=1e-5), (loss, ref)

    # Test 2: multi-tile grid with a ragged (masked) final tile.
    ka, kb, kc, kd = jax.random.split(k2, 4)
    B2, C2 = 20, 48
    output2 = jax.random.normal(ka, (B2, C2), dtype=jnp.float32)
    target2 = jnp.stack(
        [
            jax.random.randint(kb, (B2,), 0, C2).astype(jnp.float32),
            jax.random.randint(kc, (B2,), 0, C2).astype(jnp.float32),
            jax.random.uniform(kd, (B2,), dtype=jnp.float32),
        ],
        axis=1,
    )
    loss2 = mixup_loss(output2, target2, block_b=8)        # grid = 3, last tile padded
    jax.block_until_ready(loss2)
    ref2 = mixup_loss_ref(output2, target2)
    assert jnp.allclose(loss2, ref2, rtol=1e-5, atol=1e-5), (loss2, ref2)

    # Test 3: bf16 logits (bf16 elementwise chain on v6e/v7x, f32 path elsewhere).
    ke, kf, kg, kh = jax.random.split(jax.random.fold_in(key, 3), 4)
    B3, C3 = 16, 64
    output3 = jax.random.normal(ke, (B3, C3), dtype=jnp.float32).astype(jnp.bfloat16)
    target3 = jnp.stack(
        [
            jax.random.randint(kf, (B3,), 0, C3).astype(jnp.float32),
            jax.random.randint(kg, (B3,), 0, C3).astype(jnp.float32),
            jax.random.uniform(kh, (B3,), dtype=jnp.float32),
        ],
        axis=1,
    )
    loss3 = mixup_loss(output3, target3, block_b=8)        # grid = 2
    jax.block_until_ready(loss3)
    ref3 = mixup_loss_ref(output3, target3)
    assert jnp.allclose(loss3, ref3, rtol=5e-2, atol=5e-2), (loss3, ref3)

    print("KERNEL_OK")
</pallas_src>

<mosaic_0001>
module attributes {stable_mosaic.version = 11 : i64} {
  func.func @_mixup_ce_kernel(%arg0: i32, %arg1: memref<8x32xf32, #tpu.memory_space<vmem>>, %arg2: memref<8x3xf32, #tpu.memory_space<vmem>>, %arg3: memref<1x128xf32, #tpu.memory_space<vmem>>) attributes {dimension_semantics = [#tpu.dimension_semantics<parallel>], iteration_bounds = array<i64: 1>, scalar_prefetch = 0 : i64, scratch_operands = 0 : i64, tpu.core_type = #tpu.core_type<tc>, window_params = [{transform_indices = @transform_0, window_bounds = array<i64: 8, 32>}, {transform_indices = @transform_1, window_bounds = array<i64: 8, 3>}, {transform_indices = @transform_2, window_bounds = array<i64: 1, 128>}]} {
    %c0 = arith.constant 0 : index
    %c0_0 = arith.constant 0 : index
    %0 = vector.load %arg1[%c0, %c0_0] : memref<8x32xf32, #tpu.memory_space<vmem>>, vector<8x32xf32>
    %c0_1 = arith.constant 0 : index
    %c0_2 = arith.constant 0 : index
    %1 = vector.load %arg2[%c0_1, %c0_2] : memref<8x3xf32, #tpu.memory_space<vmem>>, vector<8x3xf32>
    %2 = vector.extract_strided_slice %1 {offsets = [0, 0], sizes = [8, 1], strides = [1, 1]} : vector<8x3xf32> to vector<8x1xf32>
    %3 = arith.fptosi %2 : vector<8x1xf32> to vector<8x1xi32>
    %4 = vector.extract_strided_slice %1 {offsets = [0, 1], sizes = [8, 1], strides = [1, 1]} : vector<8x3xf32> to vector<8x1xf32>
    %5 = arith.fptosi %4 : vector<8x1xf32> to vector<8x1xi32>
    %6 = vector.extract_strided_slice %1 {offsets = [0, 2], sizes = [8, 1], strides = [1, 1]} : vector<8x3xf32> to vector<8x1xf32>
    %cst = arith.constant dense<0xFF800000> : vector<8xf32>
    %7 = vector.multi_reduction <maximumf>, %0, %cst [1] : vector<8x32xf32> to vector<8xf32>
    %8 = vector.shape_cast %7 : vector<8xf32> to vector<8x1xf32>
    %9 = vector.broadcast %8 : vector<8x1xf32> to vector<8x32xf32>
    %10 = arith.subf %0, %9 : vector<8x32xf32>
    %11 = math.exp %10 : vector<8x32xf32>
    %cst_3 = arith.constant dense<0.000000e+00> : vector<8xf32>
    %12 = vector.multi_reduction <add>, %11, %cst_3 [1] : vector<8x32xf32> to vector<8xf32>
    %13 = vector.shape_cast %12 : vector<8xf32> to vector<8x1xf32>
    %14 = math.log %13 : vector<8x1xf32>
    %15 = tpu.iota {dimensions = array<i32: 1>} : vector<8x32xi32>
    %16 = vector.broadcast %3 : vector<8x1xi32> to vector<8x32xi32>
    %17 = arith.cmpi eq, %15, %16 : vector<8x32xi32>
    %cst_4 = arith.constant 0.000000e+00 : f32
    %18 = vector.shape_cast %6 : vector<8x1xf32> to vector<8x1xf32>
    %19 = vector.broadcast %18 : vector<8x1xf32> to vector<8x32xf32>
    %20 = vector.broadcast %cst_4 : f32 to vector<8x32xf32>
    %21 = arith.select %17, %19, %20 : vector<8x32xi1>, vector<8x32xf32>
    %22 = vector.broadcast %5 : vector<8x1xi32> to vector<8x32xi32>
    %23 = arith.cmpi eq, %15, %22 : vector<8x32xi32>
    %cst_5 = arith.constant 1.000000e+00 : f32
    %24 = vector.broadcast %cst_5 : f32 to vector<8x1xf32>
    %25 = arith.subf %24, %6 : vector<8x1xf32>
    %cst_6 = arith.constant 0.000000e+00 : f32
    %26 = vector.shape_cast %25 : vector<8x1xf32> to vector<8x1xf32>
    %27 = vector.broadcast %26 : vector<8x1xf32> to vector<8x32xf32>
    %28 = vector.broadcast %cst_6 : f32 to vector<8x32xf32>
    %29 = arith.select %23, %27, %28 : vector<8x32xi1>, vector<8x32xf32>
    %30 = arith.addf %21, %29 : vector<8x32xf32>
    %31 = arith.mulf %30, %10 : vector<8x32xf32>
    %cst_7 = arith.constant dense<0.000000e+00> : vector<8xf32>
    %32 = vector.multi_reduction <add>, %31, %cst_7 [1] : vector<8x32xf32> to vector<8xf32>
    %33 = vector.shape_cast %32 : vector<8xf32> to vector<8x1xf32>
    %34 = arith.subf %14, %33 : vector<8x1xf32>
    %35 = vector.shape_cast %34 : vector<8x1xf32> to vector<1x8x1xf32>
    %cst_8 = arith.constant dense<0.000000e+00> : vector<1xf32>
    %36 = vector.multi_reduction <add>, %35, %cst_8 [1, 2] : vector<1x8x1xf32> to vector<1xf32>
    %37 = vector.shape_cast %36 : vector<1xf32> to vector<1x1x1xf32>
    %38 = vector.extract %37[0, 0, 0] : f32 from vector<1x1x1xf32>
    %39 = vector.broadcast %38 : f32 to vector<1x1xf32>
    %40 = vector.shape_cast %39 : vector<1x1xf32> to vector<1x1xf32>
    %41 = vector.broadcast %40 : vector<1x1xf32> to vector<1x128xf32>
    %c0_9 = arith.constant 0 : index
    %c0_10 = arith.constant 0 : index
    %42 = vector.load %arg3[%c0_9, %c0_10] : memref<1x128xf32, #tpu.memory_space<vmem>>, vector<1x128xf32>
    tpu.vector_store %arg3[%c0_9, %c0_10], %41 {strides = array<i32>} : memref<1x128xf32, #tpu.memory_space<vmem>>, vector<1x128xf32>,
    return
  }
  func.func @transform_0(%arg0: i32) -> (i32, i32) {
    %c0_i32 = arith.constant 0 : i32
    %c0_i32_0 = arith.constant 0 : i32
    return %arg0, %c0_i32 : i32, i32
  }
  func.func @transform_1(%arg0: i32) -> (i32, i32) {
    %c0_i32 = arith.constant 0 : i32
    %c0_i32_0 = arith.constant 0 : i32
    return %arg0, %c0_i32 : i32, i32
  }
  func.func @transform_2(%arg0: i32) -> (i32, i32) {
    %c0_i32 = arith.constant 0 : i32
    %c0_i32_0 = arith.constant 0 : i32
    return %arg0, %c0_i32 : i32, i32
  }
}

</mosaic_0001>

<llo_original>
// kernel: tpu_custom_call.1
$region0: #{tpu_custom_call.1}
  #allocation0 [shape = 'u32[]', space=smem, size = 0x4, offset = 0x4, fixed_abs, tag = 'smem constant byte address 0x4 - core index']
  #allocation1 [shape = 'u32[144,128]{1,0:T(1,128)}', space=vmem, size = 0x12000, scoped, tag = 'internal scratch']
  %s0 = inlined_call_operand.vmem [shape: f32[8,32], index: 0, kind: input, shape index: {}]
  %s1 = inlined_call_operand.vmem [shape: f32[8,3], index: 1, kind: input, shape index: {}]
  %s2 = inlined_call_operand.hbm [shape: f32[1,128], index: 2, kind: output, shape index: {}]
  %s3 = sld [smem:[#allocation0]]
  $region18: #{tpu_custom_call.1} parent=0
    _
  %s5 = ssub.s32 1, %s3
  %s6 = scalar_select 0, %s5, %s3
  $region1: #{tpu_custom_call.1} parent=0
    #allocation2 [shape = 'u8[512]{0}', space=vmem, size = 0x400, scoped, tag = 'output window, operand 0, single buffered']
    #allocation3 [shape = 's32[1]{0}', space=sflag, size = 0x4, scoped, tag = 'scoped memory for tpu_custom_call.1']
    %7 = vsyncpa [#allocation3], 0
    // Predicated region
    $region2: #{tpu_custom_call.1} parent=1 // pred_check
      _
    $region3: #{tpu_custom_call.1} parent=1 // pred_check_branch
      %9 = sbr.rel (0) target = $region5
    $region4: #{tpu_custom_call.1} parent=1 // pred_region
      _
    $region5: #{tpu_custom_call.1} parent=1 // pred_fallthru
      _
    // Predicated region
    $region6: #{tpu_custom_call.1} parent=1 // pred_check
      _
    $region7: #{tpu_custom_call.1} parent=1 // pred_check_branch
      %11 = sbr.rel (0) target = $region9
    $region8: #{tpu_custom_call.1} parent=1 // pred_region
      _
    $region9: #{tpu_custom_call.1} parent=1 // pred_fallthru
      _
    %v12 = vld [vmem:[%s0] sm:$0xff]
    %v13 = vld [vmem:[%s1] sm:$0xff]
    %v14 = vcvt.f32.s32.to.zero.pseudo %v13
    %vm15 = vcmask 261120
    %v16 = vsel %vm15, %v12, -inf
    %17 = vmax.xlane.f32.xlu0 %v16
    %v18 = vpop.xlane.xlu0 %17
    %v19 = vsub.f32 %v12, %v18
    %v20 = vmul.f32 %v19, 1.442695
    %v21 = vpow.pop %v20
    %v22 = vsel %vm15, %v21, 0.0
    %23 = vadd.xlane.f32.xlu0 %v22
    %v24 = vpop.xlane.xlu0 %23
    %v25 = vlog2.pop %v24
    %v26 = vmul.f32 %v25, 0.6931472
    %v27 = vlaneseq
    %v28 = vand.u32 %v27, 127
    %29 = vset.pattern.permute.xlu0 0
    %30 = vperm.xlu0 %29, %v14
    %v31 = vpop.permute.xlu0 %30
    %vm32 = vcmp.eq.s32.totalorder %v28, %v31
    %34 = vset.pattern.permute.xlu0 2
    %35 = vperm.xlu0 %34, %v13
    %v36 = vpop.permute.xlu0 %35
    %v38 = vsel %vm32, %v36, 0.0
    %39 = vset.pattern.permute.xlu0 1
    %40 = vperm.xlu0 %39, %v14
    %v41 = vpop.permute.xlu0 %40
    %vm42 = vcmp.eq.s32.totalorder %v28, %v41
    %v43 = vsub.f32 1.0, %v13
    %45 = vset.pattern.permute.xlu0 2
    %46 = vperm.xlu0 %45, %v43
    %v47 = vpop.permute.xlu0 %46
    %v49 = vsel %vm42, %v47, 0.0
    %v50 = vadd.f32 %v38, %v49
    %v51 = vmul.f32 %v50, %v19
    %v52 = vsel %vm15, %v51, 0.0
    %53 = vadd.xlane.f32.xlu0 %v52
    %v54 = vpop.xlane.xlu0 %53
    %v55 = vsub.f32 %v26, %v54
    %vm56 = vcmask 7168
    %v57 = vsel %vm56, %v55, 0.0
    %58 = vadd.xlane.f32.xlu0 %v57
    %v59 = vpop.xlane.xlu0 %58
    %v60 = vrot.slane %v59, 4
    %v61 = vadd.f32 %v59, %v60
    %v62 = vrot.slane %v61, 2
    %v63 = vadd.f32 %v61, %v62
    %v64 = vrot.slane %v63, 1
    %v65 = vadd.f32 %v63, %v64
    %s66 = vtos %v65
    %v67 = vstv %s66
    %68 = vst [vmem:[#allocation2] sm:$0x1] %v67
    // Predicated region
    $region10: #{tpu_custom_call.1} parent=1 // pred_check
      _
    $region11: #{tpu_custom_call.1} parent=1 // pred_check_branch
      %70 = sbr.rel (0) target = $region13
    $region12: #{tpu_custom_call.1} parent=1 // pred_region
      %s72 = ssub.s32 16, 16
      %73 = vsyncadd [#allocation3], %s72
      %s75 = sshll.u32 [#allocation2], 4
      %s76 = int_to_ptr.vmem [resolvable:$true] %s75
      %78 = dma.vmem_to_hbm [thread:$0]  %s76, 16, %s2, [#allocation3]
    $region13: #{tpu_custom_call.1} parent=1 // pred_fallthru
      _
    // Predicated region
    $region14: #{tpu_custom_call.1} parent=1 // pred_check
      _
    $region15: #{tpu_custom_call.1} parent=1 // pred_check_branch
      %80 = sbr.rel (0) target = $region17
    $region16: #{tpu_custom_call.1} parent=1 // pred_region
      %81 = dma.done [#allocation3], 16
    $region17: #{tpu_custom_call.1} parent=1 // pred_fallthru
      _
    %82 = vsyncpa [#allocation3], 1

</llo_original>
